<compile_context>
chip_gen: v5e
topology: v5e:2x2
jax: 0.10.0
libtpu: 0.0.40
codegen_flags: <defaults>
</compile_context>

<pallas_src>
import jax
import jax.numpy as jnp
from jax.experimental import pallas as pl
from jax.experimental.pallas import tpu as pltpu


NEG_SLOPE = 0.01  # nn.LeakyReLU() default


def _round_up(x, m):
    return ((x + m - 1) // m) * m


def _cdiv(a, b):
    return (a + b - 1) // b


def _pad8(c):
    return _round_up(c, 8)


def entropy_params_kernel(x_ref, w1_ref, b1_ref, w2_ref, b2_ref, w3_ref, b3_ref,
                          o_ref):
    # x_ref: (Bt, C_in, tile)   w_i: (C_i, C_{i-1})   b_i: (C_i, 1)
    # o_ref: (Bt, C3, tile)     pixels = lane axis (multiple of 128 or full HW)
    w1, b1 = w1_ref[...], b1_ref[...]
    w2, b2 = w2_ref[...], b2_ref[...]
    w3, b3 = w3_ref[...], b3_ref[...]

    # Static unrolled loop over the (small) batch rows folded into this block.
    for b in range(x_ref.shape[0]):
        x = x_ref[b].astype(jnp.float32)

        h1 = jnp.dot(w1, x, preferred_element_type=jnp.float32) + b1
        h1 = jnp.maximum(h1, NEG_SLOPE * h1)

        h2 = jnp.dot(w2, h1, preferred_element_type=jnp.float32) + b2
        h2 = jnp.maximum(h2, NEG_SLOPE * h2)

        h3 = jnp.dot(w3, h2, preferred_element_type=jnp.float32) + b3

        o_ref[b] = h3.astype(o_ref.dtype)


def entropy_parameters_forward(x_nchw, params, *, tile_hw=8192, io_dtype=None,
                               target_step_bytes=2 << 20, max_batch_fold=8):
    """x_nchw: (B, C_in, H, W). Returns (B, C3, H, W)."""
    w1t, b1, w2t, b2, w3t, b3 = params      # wi: (C_i, C_{i-1}), b_i: (C_i, 1)
    B, C_in, H, W = x_nchw.shape
    C1, C2, C3 = w1t.shape[0], w2t.shape[0], w3t.shape[0]
    HW = H * W

    # NCHW -> (B, C_in, H*W): contiguous, free reshape.  Pixels become lanes.
    x3d = x_nchw.reshape(B, C_in, HW)
    if io_dtype is not None:
        x3d = x3d.astype(io_dtype)
    out_dtype = x3d.dtype
    itemsize = jnp.dtype(out_dtype).itemsize

    # ---- pixel tile -------------------------------------------------------
    if HW <= 128:
        tile = HW                              # full-extent last dim is legal
    else:
        # multiple of 128, no bigger than the array (ragged last block is OK)
        tile = min(_round_up(tile_hw, 128), (HW // 128) * 128)

    # Double-buffered I/O + f32 intermediates per step; keep well under v7x's
    # 64 MiB VMEM (v5e/v6e have 128 MiB, so this is safe everywhere).
    vmem_budget = 24 << 20

    def step_vmem_bytes(bt_, tile_):
        io = 2 * bt_ * (_pad8(C_in) + _pad8(C3)) * tile_ * itemsize
        mid = (_pad8(C1) + _pad8(C2)) * tile_ * 4
        return io + mid

    while tile > 128 and step_vmem_bytes(1, tile) > vmem_budget:
        tile = max(128, _round_up(tile // 2, 128))

    # ---- batch folding (amortize per-step overhead when HW is small) ------
    bt = 1
    if B > 1:
        per_b_traffic = (C_in + C3) * tile * itemsize
        bt = int(min(B, max_batch_fold,
                     max(1, target_step_bytes // max(per_b_traffic, 1))))
        while bt > 1 and step_vmem_bytes(bt, tile) > vmem_budget:
            bt -= 1

    # ---- guarantee >=2 grid steps for v7x's two TensorCores ----------------
    def total_steps(bt_, tile_):
        return _cdiv(B, bt_) * _cdiv(HW, tile_)

    if total_steps(bt, tile) < 2:
        if bt > 1:
            bt = max(1, bt // 2)
        elif HW > 128 and tile >= 256:
            tile = _round_up(_cdiv(HW, 2), 128)

    grid = (_cdiv(B, bt), _cdiv(HW, tile))
    full = lambda i, j: (0, 0)

    w_bytes = (C1 * C_in + C2 * C1 + C3 * C2 + C1 + C2 + C3) * 4
    vmem_limit = int(min(max(2 * (step_vmem_bytes(bt, tile) + w_bytes), 16 << 20),
                         48 << 20))

    out = pl.pallas_call(
        entropy_params_kernel,
        out_shape=jax.ShapeDtypeStruct((B, C3, HW), out_dtype),
        grid_spec=pltpu.PrefetchScalarGridSpec(
            num_scalar_prefetch=0,
            grid=grid,
            in_specs=[
                pl.BlockSpec((bt, C_in, tile), lambda i, j: (i, 0, j)),
                pl.BlockSpec((C1, C_in), full),
                pl.BlockSpec((C1, 1), full),
                pl.BlockSpec((C2, C1), full),
                pl.BlockSpec((C2, 1), full),
                pl.BlockSpec((C3, C2), full),
                pl.BlockSpec((C3, 1), full),
            ],
            out_specs=pl.BlockSpec((bt, C3, tile), lambda i, j: (i, 0, j)),
        ),
        compiler_params=pltpu.CompilerParams(
            dimension_semantics=("parallel", "parallel"),
            vmem_limit_bytes=vmem_limit),
    )(x3d, w1t, b1, w2t, b2, w3t, b3)

    return out.reshape(B, C3, H, W)


def init_params(key, channel_in):
    """Deterministic synthetic init matching the PyTorch layer shapes.

    Weights are stored as (C_out, C_in) (the squeezed 1x1 Conv2d weight) and
    biases as (C_out, 1) so the kernel computes W @ x + b with pixels on lanes.
    """
    channel_mid = channel_in // 4
    c1 = channel_mid * 10 // 3
    c2 = channel_mid * 8 // 3
    c3 = channel_mid * 2

    dims = [(channel_in, c1), (c1, c2), (c2, c3)]
    params = []
    for i, (cin, cout) in enumerate(dims):
        kw, kb = jax.random.split(jax.random.fold_in(key, i))
        bound = (1.0 / cin) ** 0.5  # PyTorch default conv init bound
        w = jax.random.uniform(kw, (cout, cin), jnp.float32, -bound, bound)
        b = jax.random.uniform(kb, (cout, 1), jnp.float32, -bound, bound)
        params.extend([w, b])
    return tuple(params)


def reference_forward(x_nchw, params):
    def lrelu(x):
        return jnp.where(x >= 0, x, NEG_SLOPE * x)
    w1t, b1, w2t, b2, w3t, b3 = params
    B, C, H, W = x_nchw.shape
    x = x_nchw.reshape(B, C, H * W)
    h = lrelu(jnp.einsum('oc,bcp->bop', w1t, x) + b1[None])
    h = lrelu(jnp.einsum('oc,bcp->bop', w2t, h) + b2[None])
    h = jnp.einsum('oc,bcp->bop', w3t, h) + b3[None]
    return h.reshape(B, -1, H, W)


if __name__ == "__main__":
    key = jax.random.PRNGKey(0)
    kx, kp = jax.random.split(key)

    # channel_in=32 -> mid=8, layers 32 -> 26 -> 21 -> 16
    B, C_in, Hs, Ws = 2, 32, 16, 16
    x = jax.random.normal(kx, (B, C_in, Hs, Ws), jnp.float32)
    params = init_params(kp, C_in)

    y = entropy_parameters_forward(x, params)
    y = jax.block_until_ready(y)

    y_ref = reference_forward(x, params)
    assert y.shape == y_ref.shape, (y.shape, y_ref.shape)
    assert jnp.allclose(y, y_ref, atol=1e-4, rtol=1e-4), "mismatch vs reference"

    print("KERNEL_OK")
</pallas_src>

<mosaic_0001>
module attributes {stable_mosaic.version = 11 : i64} {
  func.func @entropy_params_kernel(%arg0: i32, %arg1: i32, %arg2: memref<1x32x256xf32, #tpu.memory_space<vmem>>, %arg3: memref<26x32xf32, #tpu.memory_space<vmem>>, %arg4: memref<26x1xf32, #tpu.memory_space<vmem>>, %arg5: memref<21x26xf32, #tpu.memory_space<vmem>>, %arg6: memref<21x1xf32, #tpu.memory_space<vmem>>, %arg7: memref<16x21xf32, #tpu.memory_space<vmem>>, %arg8: memref<16x1xf32, #tpu.memory_space<vmem>>, %arg9: memref<1x16x256xf32, #tpu.memory_space<vmem>>) attributes {dimension_semantics = [#tpu.dimension_semantics<parallel>, #tpu.dimension_semantics<parallel>], iteration_bounds = array<i64: 2, 1>, scalar_prefetch = 0 : i64, scratch_operands = 0 : i64, tpu.core_type = #tpu.core_type<tc>, window_params = [{transform_indices = @transform_0, window_bounds = array<i64: 1, 32, 256>}, {pipeline_mode = #tpu.pipeline_mode<synchronous>, transform_indices = @transform_1, window_bounds = array<i64: 26, 32>}, {pipeline_mode = #tpu.pipeline_mode<synchronous>, transform_indices = @transform_2, window_bounds = array<i64: 26, 1>}, {pipeline_mode = #tpu.pipeline_mode<synchronous>, transform_indices = @transform_3, window_bounds = array<i64: 21, 26>}, {pipeline_mode = #tpu.pipeline_mode<synchronous>, transform_indices = @transform_4, window_bounds = array<i64: 21, 1>}, {pipeline_mode = #tpu.pipeline_mode<synchronous>, transform_indices = @transform_5, window_bounds = array<i64: 16, 21>}, {pipeline_mode = #tpu.pipeline_mode<synchronous>, transform_indices = @transform_6, window_bounds = array<i64: 16, 1>}, {transform_indices = @transform_7, window_bounds = array<i64: 1, 16, 256>}]} {
    %c0 = arith.constant 0 : index
    %c0_0 = arith.constant 0 : index
    %0 = vector.load %arg3[%c0, %c0_0] : memref<26x32xf32, #tpu.memory_space<vmem>>, vector<26x32xf32>
    %c0_1 = arith.constant 0 : index
    %c0_2 = arith.constant 0 : index
    %1 = vector.load %arg4[%c0_1, %c0_2] : memref<26x1xf32, #tpu.memory_space<vmem>>, vector<26x1xf32>
    %c0_3 = arith.constant 0 : index
    %c0_4 = arith.constant 0 : index
    %2 = vector.load %arg5[%c0_3, %c0_4] : memref<21x26xf32, #tpu.memory_space<vmem>>, vector<21x26xf32>
    %c0_5 = arith.constant 0 : index
    %c0_6 = arith.constant 0 : index
    %3 = vector.load %arg6[%c0_5, %c0_6] : memref<21x1xf32, #tpu.memory_space<vmem>>, vector<21x1xf32>
    %c0_7 = arith.constant 0 : index
    %c0_8 = arith.constant 0 : index
    %4 = vector.load %arg7[%c0_7, %c0_8] : memref<16x21xf32, #tpu.memory_space<vmem>>, vector<16x21xf32>
    %c0_9 = arith.constant 0 : index
    %c0_10 = arith.constant 0 : index
    %5 = vector.load %arg8[%c0_9, %c0_10] : memref<16x1xf32, #tpu.memory_space<vmem>>, vector<16x1xf32>
    %c0_11 = arith.constant 0 : index
    %c0_12 = arith.constant 0 : index
    %c0_13 = arith.constant 0 : index
    %6 = vector.load %arg2[%c0_11, %c0_12, %c0_13] : memref<1x32x256xf32, #tpu.memory_space<vmem>>, vector<1x32x256xf32>
    %7 = vector.shape_cast %6 : vector<1x32x256xf32> to vector<32x256xf32>
    %cst = arith.constant dense<0.000000e+00> : vector<26x256xf32>
    %8 = tpu.matmul %0, %7, %cst {dimension_numbers = #tpu.dot_dimension_numbers<[1], [0], [0], [1], [0, 0, 1, 1], [], []>} : vector<26x32xf32>, vector<32x256xf32>, vector<26x256xf32> -> vector<26x256xf32>
    %9 = vector.broadcast %1 : vector<26x1xf32> to vector<26x256xf32>
    %10 = arith.addf %8, %9 : vector<26x256xf32>
    %cst_14 = arith.constant 0.00999999977 : f32
    %11 = vector.broadcast %cst_14 : f32 to vector<26x256xf32>
    %12 = arith.mulf %11, %10 : vector<26x256xf32>
    %13 = arith.maximumf %10, %12 : vector<26x256xf32>
    %cst_15 = arith.constant dense<0.000000e+00> : vector<21x256xf32>
    %14 = tpu.matmul %2, %13, %cst_15 {dimension_numbers = #tpu.dot_dimension_numbers<[1], [0], [0], [1], [0, 0, 1, 1], [], []>} : vector<21x26xf32>, vector<26x256xf32>, vector<21x256xf32> -> vector<21x256xf32>
    %15 = vector.broadcast %3 : vector<21x1xf32> to vector<21x256xf32>
    %16 = arith.addf %14, %15 : vector<21x256xf32>
    %cst_16 = arith.constant 0.00999999977 : f32
    %17 = vector.broadcast %cst_16 : f32 to vector<21x256xf32>
    %18 = arith.mulf %17, %16 : vector<21x256xf32>
    %19 = arith.maximumf %16, %18 : vector<21x256xf32>
    %cst_17 = arith.constant dense<0.000000e+00> : vector<16x256xf32>
    %20 = tpu.matmul %4, %19, %cst_17 {dimension_numbers = #tpu.dot_dimension_numbers<[1], [0], [0], [1], [0, 0, 1, 1], [], []>} : vector<16x21xf32>, vector<21x256xf32>, vector<16x256xf32> -> vector<16x256xf32>
    %21 = vector.broadcast %5 : vector<16x1xf32> to vector<16x256xf32>
    %22 = arith.addf %20, %21 : vector<16x256xf32>
    %c0_18 = arith.constant 0 : index
    %c0_19 = arith.constant 0 : index
    %c0_20 = arith.constant 0 : index
    %23 = vector.load %arg9[%c0_18, %c0_19, %c0_20] : memref<1x16x256xf32, #tpu.memory_space<vmem>>, vector<1x16x256xf32>
    %24 = vector.shape_cast %23 : vector<1x16x256xf32> to vector<16x256xf32>
    %25 = vector.shape_cast %22 : vector<16x256xf32> to vector<1x16x256xf32>
    tpu.vector_store %arg9[%c0_18, %c0_19, %c0_20], %25 {strides = array<i32>} : memref<1x16x256xf32, #tpu.memory_space<vmem>>, vector<1x16x256xf32>,
    return
  }
  func.func @transform_0(%arg0: i32, %arg1: i32) -> (i32, i32, i32) {
    %c0_i32 = arith.constant 0 : i32
    %c0_i32_0 = arith.constant 0 : i32
    return %arg0, %c0_i32, %arg1 : i32, i32, i32
  }
  func.func @transform_1(%arg0: i32, %arg1: i32) -> (i32, i32) {
    %c0_i32 = arith.constant 0 : i32
    %c0_i32_0 = arith.constant 0 : i32
    %c0_i32_1 = arith.constant 0 : i32
    return %c0_i32, %c0_i32_0 : i32, i32
  }
  func.func @transform_2(%arg0: i32, %arg1: i32) -> (i32, i32) {
    %c0_i32 = arith.constant 0 : i32
    %c0_i32_0 = arith.constant 0 : i32
    %c0_i32_1 = arith.constant 0 : i32
    return %c0_i32, %c0_i32_0 : i32, i32
  }
  func.func @transform_3(%arg0: i32, %arg1: i32) -> (i32, i32) {
    %c0_i32 = arith.constant 0 : i32
    %c0_i32_0 = arith.constant 0 : i32
    %c0_i32_1 = arith.constant 0 : i32
    return %c0_i32, %c0_i32_0 : i32, i32
  }
  func.func @transform_4(%arg0: i32, %arg1: i32) -> (i32, i32) {
    %c0_i32 = arith.constant 0 : i32
    %c0_i32_0 = arith.constant 0 : i32
    %c0_i32_1 = arith.constant 0 : i32
    return %c0_i32, %c0_i32_0 : i32, i32
  }
  func.func @transform_5(%arg0: i32, %arg1: i32) -> (i32, i32) {
    %c0_i32 = arith.constant 0 : i32
    %c0_i32_0 = arith.constant 0 : i32
    %c0_i32_1 = arith.constant 0 : i32
    return %c0_i32, %c0_i32_0 : i32, i32
  }
  func.func @transform_6(%arg0: i32, %arg1: i32) -> (i32, i32) {
    %c0_i32 = arith.constant 0 : i32
    %c0_i32_0 = arith.constant 0 : i32
    %c0_i32_1 = arith.constant 0 : i32
    return %c0_i32, %c0_i32_0 : i32, i32
  }
  func.func @transform_7(%arg0: i32, %arg1: i32) -> (i32, i32, i32) {
    %c0_i32 = arith.constant 0 : i32
    %c0_i32_0 = arith.constant 0 : i32
    return %arg0, %c0_i32, %arg1 : i32, i32, i32
  }
}

</mosaic_0001>

<llo_original>
// kernel: tpu_custom_call.1
$region0: #{tpu_custom_call.1}
  #allocation0 [shape = 'u32[]', space=smem, size = 0x4, offset = 0x4, fixed_abs, tag = 'smem constant byte address 0x4 - core index']
  #allocation1 [shape = 'u32[72,128]{1,0:T(1,128)}', space=vmem, size = 0x9000, scoped, tag = 'internal scratch']
  %s0 = inlined_call_operand.hbm [shape: f32[2,32,256], index: 0, kind: input, shape index: {}]
  %s1 = inlined_call_operand.vmem [shape: f32[26,32], index: 1, kind: input, shape index: {}]
  %s2 = inlined_call_operand.vmem [shape: f32[26,1], index: 2, kind: input, shape index: {}]
  %s3 = inlined_call_operand.vmem [shape: f32[21,26], index: 3, kind: input, shape index: {}]
  %s4 = inlined_call_operand.vmem [shape: f32[21,1], index: 4, kind: input, shape index: {}]
  %s5 = inlined_call_operand.vmem [shape: f32[16,21], index: 5, kind: input, shape index: {}]
  %s6 = inlined_call_operand.vmem [shape: f32[16,1], index: 6, kind: input, shape index: {}]
  %s7 = inlined_call_operand.hbm [shape: f32[2,16,256], index: 7, kind: output, shape index: {}]
  %s8 = sld [smem:[#allocation0]]
  $region65: #{tpu_custom_call.1} parent=0
    _
  %s10 = ssub.s32 1, %s8
  %s11 = scalar_select 0, %s10, %s8
  $region1: #{tpu_custom_call.1} parent=0
    #allocation2 [shape = 'u8[65536]{0}', space=vmem, size = 0x10000, scoped, tag = 'input window, operand 0']
    #allocation3 [shape = 's32[2]{0}', space=sflag, size = 0x8, scoped, tag = 'scoped memory for tpu_custom_call.1']
    #allocation4 [shape = 's32[2]{0}', space=sflag, size = 0x8, scoped, tag = 'scoped memory for tpu_custom_call.1']
    #allocation5 [shape = 'u8[32768]{0}', space=vmem, size = 0x8000, scoped, tag = 'output window, operand 0']
    %12 = vsyncpa [#allocation3], 0
    %s13 = scalar_lea.sflag [#allocation3], 1
    %14 = vsyncpa %s13, 0
    %15 = vsyncpa [#allocation4], 0
    %s16 = scalar_lea.sflag [#allocation4], 1
    %17 = vsyncpa %s16, 0
    loop: start=0, step=1, limit=4
    $region2: #{tpu_custom_call.1} parent=1 // loop_pre_header
      _
    $region3: #{tpu_custom_call.1} parent=1 // loop_header
      %s19 = sphi 0, %s23
      %p20 = scmp.ge.s32.totalorder %s19, 4
      %s26 = sphi 0, %s38
      %s27 = sphi 0, %s34
      %s28 = sphi 0, %s26
      %s29 = sphi 0, %s27
      %s30 = sphi 0, %s28
      %s31 = sphi 0, %s29
      %s43 = sphi 0, %s45
      %s46 = sphi 0, %s43
      %s47 = sphi 0, %s46
      %s63 = sphi 0, %s47
      %s67 = sphi 0, %s67
      %s69 = sphi 0, %s67
      %s70 = sphi 0, %s69
      %s84 = sphi 0, %s70
      %s88 = sphi 0, %s88
      %s90 = sphi 0, %s88
      %s91 = sphi 0, %s90
      %s105 = sphi 0, %s91
      %s109 = sphi 0, %s109
      %s111 = sphi 0, %s109
      %s112 = sphi 0, %s111
      %s126 = sphi 0, %s112
      %s130 = sphi 0, %s130
      %s132 = sphi 0, %s130
      %s133 = sphi 0, %s132
      %s147 = sphi 0, %s133
      %s151 = sphi 0, %s151
      %s153 = sphi 0, %s151
      %s154 = sphi 0, %s153
      %s168 = sphi 0, %s154
      %s172 = sphi 0, %s172
      %s174 = sphi 0, %s172
      %s175 = sphi 0, %s174
      %s189 = sphi 0, %s175
      %s197 = sphi 0, %s199
      %s200 = sphi 0, %s197
      %s201 = sphi 0, %s200
      %s217 = sphi 0, %s201
    $region4: #{tpu_custom_call.1} parent=1 // loop_header_branch
      %22 = sbr.rel (%p20) target = $region8
    $region5: #{tpu_custom_call.1} parent=1 // loop_body
      %s24 = ssub.s32 %s19, 1
      %s25 = ssub.s32 %s19, 2
      %s32 = sadd.s32 1, %s27
      %p33 = scmp.ge.s32.totalorder %s32, 1
      %s34 = scalar_select %p33, 0, %s32
      %s35 = sadd.s32 1, %s26
      %s36 = scalar_select %p33, %s35, %s26
      %p37 = scmp.ge.s32.totalorder %s36, 2
      %s38 = scalar_select %p37, 0, %s36
      %s39 = ssub.s32 %s26, %s38
      %s40 = ssub.s32 %s27, %s34
      %s41 = sor.u32 %s39, %s40
      %p42 = scmp.eq.s32.totalorder %s41, 0
      %s44 = sadd.s32 %s43, 1
      %s45 = scalar_select %p42, %s43, %s44
      %p48 = pneg %p42
      %p49 = scmp.eq.s32.totalorder %s19, 1
      %p50 = por %p48, %p49
      %p51 = scmp.ne.s32.totalorder %s43, %s46
      %p52 = scmp.eq.s32.totalorder %s19, 0
      %p53 = por %p51, %p52
      %p54 = scmp.ne.s32.totalorder %s43, %s46
      %p55 = scmp.eq.s32.totalorder %s24, 1
      %p56 = por %p54, %p55
      %p57 = scmp.ne.s32.totalorder %s46, %s47
      %p58 = scmp.eq.s32.totalorder %s24, 0
      %p59 = por %p57, %p58
      %p60 = scmp.ne.s32.totalorder %s46, %s47
      %p61 = scmp.eq.s32.totalorder %s25, 1
      %p62 = por %p60, %p61
      %p64 = scmp.ne.s32.totalorder %s47, %s63
      %p65 = scmp.eq.s32.totalorder %s25, 0
      %p66 = por %p64, %p65
      %s68 = sadd.s32 %s67, 1
      %p71 = scmp.eq.s32.totalorder %s19, 1
      %p72 = scmp.ne.s32.totalorder %s67, %s69
      %p73 = scmp.eq.s32.totalorder %s19, 0
      %p74 = por %p72, %p73
      %p75 = scmp.ne.s32.totalorder %s67, %s69
      %p76 = scmp.eq.s32.totalorder %s24, 1
      %p77 = por %p75, %p76
      %p78 = scmp.ne.s32.totalorder %s69, %s70
      %p79 = scmp.eq.s32.totalorder %s24, 0
      %p80 = por %p78, %p79
      %p81 = scmp.ne.s32.totalorder %s69, %s70
      %p82 = scmp.eq.s32.totalorder %s25, 1
      %p83 = por %p81, %p82
      %p85 = scmp.ne.s32.totalorder %s70, %s84
      %p86 = scmp.eq.s32.totalorder %s25, 0
      %p87 = por %p85, %p86
      %s89 = sadd.s32 %s88, 1
      %p92 = scmp.eq.s32.totalorder %s19, 1
      %p93 = scmp.ne.s32.totalorder %s88, %s90
      %p94 = scmp.eq.s32.totalorder %s19, 0
      %p95 = por %p93, %p94
      %p96 = scmp.ne.s32.totalorder %s88, %s90
      %p97 = scmp.eq.s32.totalorder %s24, 1
      %p98 = por %p96, %p97
      %p99 = scmp.ne.s32.totalorder %s90, %s91
      %p100 = scmp.eq.s32.totalorder %s24, 0
      %p101 = por %p99, %p100
      %p102 = scmp.ne.s32.totalorder %s90, %s91
      %p103 = scmp.eq.s32.totalorder %s25, 1
      %p104 = por %p102, %p103
      %p106 = scmp.ne.s32.totalorder %s91, %s105
      %p107 = scmp.eq.s32.totalorder %s25, 0
      %p108 = por %p106, %p107
      %s110 = sadd.s32 %s109, 1
      %p113 = scmp.eq.s32.totalorder %s19, 1
      %p114 = scmp.ne.s32.totalorder %s109, %s111
      %p115 = scmp.eq.s32.totalorder %s19, 0
      %p116 = por %p114, %p115
      %p117 = scmp.ne.s32.totalorder %s109, %s111
      %p118 = scmp.eq.s32.totalorder %s24, 1
      %p119 = por %p117, %p118
      %p120 = scmp.ne.s32.totalorder %s111, %s112
      %p121 = scmp.eq.s32.totalorder %s24, 0
      %p122 = por %p120, %p121
      %p123 = scmp.ne.s32.totalorder %s111, %s112
      %p124 = scmp.eq.s32.totalorder %s25, 1
      %p125 = por %p123, %p124
      %p127 = scmp.ne.s32.totalorder %s112, %s126
      %p128 = scmp.eq.s32.totalorder %s25, 0
      %p129 = por %p127, %p128
      %s131 = sadd.s32 %s130, 1
      %p134 = scmp.eq.s32.totalorder %s19, 1
      %p135 = scmp.ne.s32.totalorder %s130, %s132
      %p136 = scmp.eq.s32.totalorder %s19, 0
      %p137 = por %p135, %p136
      %p138 = scmp.ne.s32.totalorder %s130, %s132
      %p139 = scmp.eq.s32.totalorder %s24, 1
      %p140 = por %p138, %p139
      %p141 = scmp.ne.s32.totalorder %s132, %s133
      %p142 = scmp.eq.s32.totalorder %s24, 0
      %p143 = por %p141, %p142
      %p144 = scmp.ne.s32.totalorder %s132, %s133
      %p145 = scmp.eq.s32.totalorder %s25, 1
      %p146 = por %p144, %p145
      %p148 = scmp.ne.s32.totalorder %s133, %s147
      %p149 = scmp.eq.s32.totalorder %s25, 0
      %p150 = por %p148, %p149
      %s152 = sadd.s32 %s151, 1
      %p155 = scmp.eq.s32.totalorder %s19, 1
      %p156 = scmp.ne.s32.totalorder %s151, %s153
      %p157 = scmp.eq.s32.totalorder %s19, 0
      %p158 = por %p156, %p157
      %p159 = scmp.ne.s32.totalorder %s151, %s153
      %p160 = scmp.eq.s32.totalorder %s24, 1
      %p161 = por %p159, %p160
      %p162 = scmp.ne.s32.totalorder %s153, %s154
      %p163 = scmp.eq.s32.totalorder %s24, 0
      %p164 = por %p162, %p163
      %p165 = scmp.ne.s32.totalorder %s153, %s154
      %p166 = scmp.eq.s32.totalorder %s25, 1
      %p167 = por %p165, %p166
      %p169 = scmp.ne.s32.totalorder %s154, %s168
      %p170 = scmp.eq.s32.totalorder %s25, 0
      %p171 = por %p169, %p170
      %s173 = sadd.s32 %s172, 1
      %p176 = scmp.eq.s32.totalorder %s19, 1
      %p177 = scmp.ne.s32.totalorder %s172, %s174
      %p178 = scmp.eq.s32.totalorder %s19, 0
      %p179 = por %p177, %p178
      %p180 = scmp.ne.s32.totalorder %s172, %s174
      %p181 = scmp.eq.s32.totalorder %s24, 1
      %p182 = por %p180, %p181
      %p183 = scmp.ne.s32.totalorder %s174, %s175
      %p184 = scmp.eq.s32.totalorder %s24, 0
      %p185 = por %p183, %p184
      %p186 = scmp.ne.s32.totalorder %s174, %s175
      %p187 = scmp.eq.s32.totalorder %s25, 1
      %p188 = por %p186, %p187
      %p190 = scmp.ne.s32.totalorder %s175, %s189
      %p191 = scmp.eq.s32.totalorder %s25, 0
      %p192 = por %p190, %p191
      %s193 = ssub.s32 %s26, %s38
      %s194 = ssub.s32 %s27, %s34
      %s195 = sor.u32 %s193, %s194
      %p196 = scmp.eq.s32.totalorder %s195, 0
      %s198 = sadd.s32 %s197, 1
      %s199 = scalar_select %p196, %s197, %s198
      %p202 = pneg %p196
      %p203 = scmp.eq.s32.totalorder %s19, 1
      %p204 = por %p202, %p203
      %p205 = scmp.ne.s32.totalorder %s197, %s200
      %p206 = scmp.eq.s32.totalorder %s19, 0
      %p207 = por %p205, %p206
      %p208 = scmp.ne.s32.totalorder %s197, %s200
      %p209 = scmp.eq.s32.totalorder %s24, 1
      %p210 = por %p208, %p209
      %p211 = scmp.ne.s32.totalorder %s200, %s201
      %p212 = scmp.eq.s32.totalorder %s24, 0
      %p213 = por %p211, %p212
      %p214 = scmp.ne.s32.totalorder %s200, %s201
      %p215 = scmp.eq.s32.totalorder %s25, 1
      %p216 = por %p214, %p215
      %p218 = scmp.ne.s32.totalorder %s201, %s217
      %p219 = scmp.eq.s32.totalorder %s25, 0
      %p220 = por %p218, %p219
      %p221 = scmp.le.s32.totalorder 1, %s19
      %p222 = scmp.lt.s32.totalorder %s19, 3
      %p223 = pnand %p221, %p222
      %p224 = pneg %p223
      // Predicated region
      $region9: #{tpu_custom_call.1} parent=5 // pred_check
        _
      $region10: #{tpu_custom_call.1} parent=5 // pred_check_branch
        %226 = sbr.rel (%p223) target = $region12
      $region11: #{tpu_custom_call.1} parent=5 // pred_region
        %s227 = ssub.s32 %s19, 1
        // Predicated region
        $region13: #{tpu_custom_call.1} parent=11 // pred_check
          %p228 = pneg %p80
        $region14: #{tpu_custom_call.1} parent=11 // pred_check_branch
          %230 = sbr.rel (%p228) target = $region16
        $region15: #{tpu_custom_call.1} parent=11 // pred_region
          _
        $region16: #{tpu_custom_call.1} parent=11 // pred_fallthru
          _
        // Predicated region
        $region17: #{tpu_custom_call.1} parent=11 // pred_check
          %p231 = pneg %p101
        $region18: #{tpu_custom_call.1} parent=11 // pred_check_branch
          %233 = sbr.rel (%p231) target = $region20
        $region19: #{tpu_custom_call.1} parent=11 // pred_region
          _
        $region20: #{tpu_custom_call.1} parent=11 // pred_fallthru
          _
        // Predicated region
        $region21: #{tpu_custom_call.1} parent=11 // pred_check
          %p234 = pneg %p122
        $region22: #{tpu_custom_call.1} parent=11 // pred_check_branch
          %236 = sbr.rel (%p234) target = $region24
        $region23: #{tpu_custom_call.1} parent=11 // pred_region
          _
        $region24: #{tpu_custom_call.1} parent=11 // pred_fallthru
          _
        // Predicated region
        $region25: #{tpu_custom_call.1} parent=11 // pred_check
          %p237 = pneg %p143
        $region26: #{tpu_custom_call.1} parent=11 // pred_check_branch
          %239 = sbr.rel (%p237) target = $region28
        $region27: #{tpu_custom_call.1} parent=11 // pred_region
          _
        $region28: #{tpu_custom_call.1} parent=11 // pred_fallthru
          _
        // Predicated region
        $region29: #{tpu_custom_call.1} parent=11 // pred_check
          %p240 = pneg %p164
        $region30: #{tpu_custom_call.1} parent=11 // pred_check_branch
          %242 = sbr.rel (%p240) target = $region32
        $region31: #{tpu_custom_call.1} parent=11 // pred_region
          _
        $region32: #{tpu_custom_call.1} parent=11 // pred_fallthru
          _
        // Predicated region
        $region33: #{tpu_custom_call.1} parent=11 // pred_check
          %p243 = pneg %p185
        $region34: #{tpu_custom_call.1} parent=11 // pred_check_branch
          %245 = sbr.rel (%p243) target = $region36
        $region35: #{tpu_custom_call.1} parent=11 // pred_region
          _
        $region36: #{tpu_custom_call.1} parent=11 // pred_fallthru
          _
      $region12: #{tpu_custom_call.1} parent=5 // pred_fallthru
        _
      %p246 = scmp.lt.s32.totalorder %s19, 2
      // Predicated region
      $region37: #{tpu_custom_call.1} parent=5 // pred_check
        %p247 = pneg %p246
      $region38: #{tpu_custom_call.1} parent=5 // pred_check_branch
        %249 = sbr.rel (%p247) target = $region40
      $region39: #{tpu_custom_call.1} parent=5 // pred_region
        // Predicated region
        $region41: #{tpu_custom_call.1} parent=39 // pred_check
          %p250 = pneg %p53
        $region42: #{tpu_custom_call.1} parent=39 // pred_check_branch
          %252 = sbr.rel (%p250) target = $region44
        $region43: #{tpu_custom_call.1} parent=39 // pred_region
          %s253 = sand.u32 %s43, 1
          %s254 = scalar_lea.sflag [#allocation3], %s253
          %s255 = sand.u32 %s43, 1
          %s256 = smul.addr %s255, 64
          %s257 = scalar_lea.vmem [#allocation2], %s256
          %s258 = smul.u32 2, %s27
          %260 = vsyncadd %s254, 0
          %s261 = smul.addr %s26, 8
          %s262 = sadd.s32 %s258, %s261
          %s263 = smul.addr %s262, 8
          %s264 = scalar_lea.hbm %s0, %s263
          %s265 = sshll.u32 %s264, 4
          %s266 = int_to_ptr.hbm [resolvable:$true] %s265
          %s267 = sshll.u32 %s257, 4
          %s268 = int_to_ptr.vmem [resolvable:$true] %s267
          %273 = dma.hbm_to_vmem [thread:$0]  %s266, 1024, %s268, %s254, 256, 256, 16
        $region44: #{tpu_custom_call.1} parent=39 // pred_fallthru
          _
      $region40: #{tpu_custom_call.1} parent=5 // pred_fallthru
        _
      %p274 = scmp.le.s32.totalorder 1, %s19
      %p275 = scmp.lt.s32.totalorder %s19, 3
      %p276 = pnand %p274, %p275
      %p277 = pneg %p276
      // Predicated region
      $region45: #{tpu_custom_call.1} parent=5 // pred_check
        _
      $region46: #{tpu_custom_call.1} parent=5 // pred_check_branch
        %279 = sbr.rel (%p276) target = $region48
      $region47: #{tpu_custom_call.1} parent=5 // pred_region
        %s280 = ssub.s32 %s19, 1
        %s281 = sand.u32 %s46, 1
        %s282 = scalar_lea.sflag [#allocation3], %s281
        %s283 = sand.u32 %s46, 1
        %s284 = smul.addr %s283, 64
        %s285 = scalar_lea.vmem [#allocation2], %s284
        // Predicated region
        $region49: #{tpu_custom_call.1} parent=47 // pred_check
          %p286 = pneg %p59
        $region50: #{tpu_custom_call.1} parent=47 // pred_check_branch
          %288 = sbr.rel (%p286) target = $region52
        $region51: #{tpu_custom_call.1} parent=47 // pred_region
          %290 = dma.done %s282, 1024
        $region52: #{tpu_custom_call.1} parent=47 // pred_fallthru
          _
        %s291 = sand.u32 %s46, 1
        %s292 = scalar_lea.sflag [#allocation3], %s291
        %s293 = sand.u32 %s46, 1
        %s294 = smul.addr %s293, 64
        %s295 = scalar_lea.vmem [#allocation2], %s294
        %p296 = pneg %p59
        %p297 = pneg %p56
        %p298 = pneg %p80
        %p299 = pneg %p77
        %p300 = pneg %p101
        %p301 = pneg %p98
        %p302 = pneg %p122
        %p303 = pneg %p119
        %p304 = pneg %p143
        %p305 = pneg %p140
        %p306 = pneg %p164
        %p307 = pneg %p161
        %p308 = pneg %p185
        %p309 = pneg %p182
        %p310 = pneg %p213
        %p311 = pneg %p210
        %s312 = sand.u32 %s200, 1
        %s313 = scalar_lea.sflag [#allocation4], %s312
        %s314 = sand.u32 %s200, 1
        %s315 = smul.addr %s314, 32
        %s316 = scalar_lea.vmem [#allocation5], %s315
        %s317 = smul.u32 2, %s29
        %s318 = smul.u32 2, %s29
        %v319 = vld [vmem:[%s1] sm:$0xff]
        %v320 = vld [vmem:[%s1 + $0x8] sm:$0xff]
        %v321 = vld [vmem:[%s1 + $0x10] sm:$0xff]
        %v322 = vld [vmem:[%s1 + $0x18] sm:$0x3]
        %v323 = vld [vmem:[%s2] sm:$0xff]
        %v324 = vld [vmem:[%s2 + $0x8] sm:$0xff]
        %v325 = vld [vmem:[%s2 + $0x10] sm:$0xff]
        %v326 = vld [vmem:[%s2 + $0x18] sm:$0x3]
        %v327 = vld [vmem:[%s3] sm:$0xff]
        %v328 = vld [vmem:[%s3 + $0x8] sm:$0xff]
        %v329 = vld [vmem:[%s3 + $0x10] sm:$0x1f]
        %v330 = vld [vmem:[%s4] sm:$0xff]
        %v331 = vld [vmem:[%s4 + $0x8] sm:$0xff]
        %v332 = vld [vmem:[%s4 + $0x10] sm:$0x1f]
        %v333 = vld [vmem:[%s5] sm:$0xff]
        %v334 = vld [vmem:[%s5 + $0x8] sm:$0xff]
        %v335 = vld [vmem:[%s6] sm:$0xff]
        %v336 = vld [vmem:[%s6 + $0x8] sm:$0xff]
        %v337 = vld [vmem:[%s285] sm:$0xff]
        %v338 = vld [vmem:[%s285 + $0x8] sm:$0xff]
        %v339 = vld [vmem:[%s285 + $0x10] sm:$0xff]
        %v340 = vld [vmem:[%s285 + $0x18] sm:$0xff]
        %v341 = vld [vmem:[%s285 + $0x20] sm:$0xff]
        %v342 = vld [vmem:[%s285 + $0x28] sm:$0xff]
        %v343 = vld [vmem:[%s285 + $0x30] sm:$0xff]
        %v344 = vld [vmem:[%s285 + $0x38] sm:$0xff]
        %346 = vset.pattern.permute.xlu0 0
        %347 = vperm.xlu0 %346, %v323
        %v348 = vpop.permute.xlu0 %347
        %351 = vset.pattern.permute.xlu0 0
        %352 = vperm.xlu0 %351, %v324
        %v353 = vpop.permute.xlu0 %352
        %356 = vset.pattern.permute.xlu0 0
        %357 = vperm.xlu0 %356, %v325
        %v358 = vpop.permute.xlu0 %357
        %361 = vset.pattern.permute.xlu0 0
        %362 = vperm.xlu0 %361, %v326
        %v363 = vpop.permute.xlu0 %362
        %vm365 = vcmask 261120
        %v367 = vsel %vm365, %v319, 0
        %v370 = vsel %vm365, %v320, 0
        %v373 = vsel %vm365, %v321, 0
        %v376 = vsel %vm365, %v322, 0
        %378 = vmatpush.msra.mxu0 0.0
        %379 = vmatpush.msra.mxu0 0.0
        %380 = vmatpush.msra.mxu0 0.0
        %381 = vmatpush.msra.mxu0 0.0
        %382 = vmatpush.msra.mxu0 0.0
        %383 = vmatpush.msra.mxu0 0.0
        %384 = vmatpush.msra.mxu0 0.0
        %385 = vmatpush.msra.mxu0 0.0
        %386 = vmatpush.msra.mxu0 0.0
        %387 = vmatpush.msra.mxu0 0.0
        %388 = vmatpush.msra.mxu0 0.0
        %389 = vmatpush.msra.mxu0 0.0
        %390 = vmatpush.msra.mxu0 %v343
        %391 = vmatpush.msra.mxu0 %v341
        %392 = vmatpush.msra.mxu0 %v339
        %393 = vmatpush.msra.mxu0 %v337
        %394 = vmatmul.f32.gmra.mxu0 %v367
        %v395 = vpop.f32.mrf.mxu0
        %v396 = vadd.f32 %v348, %v395
        %397 = vmatmul.f32.gmra.mxu0 %v370
        %v398 = vpop.f32.mrf.mxu0
        %v399 = vadd.f32 %v353, %v398
        %400 = vmatmul.f32.gmra.mxu0 %v373
        %v401 = vpop.f32.mrf.mxu0
        %v402 = vadd.f32 %v358, %v401
        %403 = vmatmul.f32.gmra.mxu0 %v376
        %v404 = vpop.f32.mrf.mxu0
        %v405 = vadd.f32 %v363, %v404
        %406 = vdwg.mxu0
        %407 = vmatpush.msra.mxu0 0.0
        %408 = vmatpush.msra.mxu0 0.0
        %409 = vmatpush.msra.mxu0 0.0
        %410 = vmatpush.msra.mxu0 0.0
        %411 = vmatpush.msra.mxu0 0.0
        %412 = vmatpush.msra.mxu0 0.0
        %413 = vmatpush.msra.mxu0 0.0
        %414 = vmatpush.msra.mxu0 0.0
        %415 = vmatpush.msra.mxu0 0.0
        %416 = vmatpush.msra.mxu0 0.0
        %417 = vmatpush.msra.mxu0 0.0
        %418 = vmatpush.msra.mxu0 0.0
        %419 = vmatpush.msra.mxu0 %v344
        %420 = vmatpush.msra.mxu0 %v342
        %421 = vmatpush.msra.mxu0 %v340
        %422 = vmatpush.msra.mxu0 %v338
        %423 = vmatmul.f32.gmra.mxu0 %v367
        %v424 = vpop.f32.mrf.mxu0
        %v425 = vadd.f32 %v348, %v424
        %426 = vmatmul.f32.gmra.mxu0 %v370
        %v427 = vpop.f32.mrf.mxu0
        %v428 = vadd.f32 %v353, %v427
        %429 = vmatmul.f32.gmra.mxu0 %v373
        %v430 = vpop.f32.mrf.mxu0
        %v431 = vadd.f32 %v358, %v430
        %432 = vmatmul.f32.gmra.mxu0 %v376
        %v433 = vpop.f32.mrf.mxu0
        %v434 = vadd.f32 %v363, %v433
        %435 = vdwg.mxu0
        %v436 = vmul.f32 %v396, 0.01
        %v437 = vmul.f32 %v425, 0.01
        %v438 = vmul.f32 %v399, 0.01
        %v439 = vmul.f32 %v428, 0.01
        %v440 = vmul.f32 %v402, 0.01
        %v441 = vmul.f32 %v431, 0.01
        %v442 = vmul.f32 %v405, 0.01
        %v443 = vmul.f32 %v434, 0.01
        %v444 = vmax.f32 %v396, %v436
        %v445 = vmax.f32 %v425, %v437
        %v446 = vmax.f32 %v399, %v438
        %v447 = vmax.f32 %v428, %v439
        %v448 = vmax.f32 %v402, %v440
        %v449 = vmax.f32 %v431, %v441
        %v450 = vmax.f32 %v405, %v442
        %v451 = vmax.f32 %v434, %v443
        %453 = vset.pattern.permute.xlu0 0
        %454 = vperm.xlu0 %453, %v330
        %v455 = vpop.permute.xlu0 %454
        %458 = vset.pattern.permute.xlu0 0
        %459 = vperm.xlu0 %458, %v331
        %v460 = vpop.permute.xlu0 %459
        %463 = vset.pattern.permute.xlu0 0
        %464 = vperm.xlu0 %463, %v332
        %v465 = vpop.permute.xlu0 %464
        %vm467 = vcmask 211968
        %v469 = vsel %vm467, %v327, 0
        %v472 = vsel %vm467, %v328, 0
        %v475 = vsel %vm467, %v329, 0
        %vm477 = vcmask 1041408
        %v479 = vsel %vm477, %v450, 0
        %v482 = vsel %vm477, %v451, 0
        %484 = vmatpush.msra.mxu0 0.0
        %485 = vmatpush.msra.mxu0 0.0
        %486 = vmatpush.msra.mxu0 0.0
        %487 = vmatpush.msra.mxu0 0.0
        %488 = vmatpush.msra.mxu0 0.0
        %489 = vmatpush.msra.mxu0 0.0
        %490 = vmatpush.msra.mxu0 0.0
        %491 = vmatpush.msra.mxu0 0.0
        %492 = vmatpush.msra.mxu0 0.0
        %493 = vmatpush.msra.mxu0 0.0
        %494 = vmatpush.msra.mxu0 0.0
        %495 = vmatpush.msra.mxu0 0.0
        %496 = vmatpush.msra.mxu0 %v479
        %497 = vmatpush.msra.mxu0 %v448
        %498 = vmatpush.msra.mxu0 %v446
        %499 = vmatpush.msra.mxu0 %v444
        %500 = vmatmul.f32.gmra.mxu0 %v469
        %v501 = vpop.f32.mrf.mxu0
        %v502 = vadd.f32 %v455, %v501
        %503 = vmatmul.f32.gmra.mxu0 %v472
        %v504 = vpop.f32.mrf.mxu0
        %v505 = vadd.f32 %v460, %v504
        %506 = vmatmul.f32.gmra.mxu0 %v475
        %v507 = vpop.f32.mrf.mxu0
        %v508 = vadd.f32 %v465, %v507
        %509 = vdwg.mxu0
        %510 = vmatpush.msra.mxu0 0.0
        %511 = vmatpush.msra.mxu0 0.0
        %512 = vmatpush.msra.mxu0 0.0
        %513 = vmatpush.msra.mxu0 0.0
        %514 = vmatpush.msra.mxu0 0.0
        %515 = vmatpush.msra.mxu0 0.0
        %516 = vmatpush.msra.mxu0 0.0
        %517 = vmatpush.msra.mxu0 0.0
        %518 = vmatpush.msra.mxu0 0.0
        %519 = vmatpush.msra.mxu0 0.0
        %520 = vmatpush.msra.mxu0 0.0
        %521 = vmatpush.msra.mxu0 0.0
        %522 = vmatpush.msra.mxu0 %v482
        %523 = vmatpush.msra.mxu0 %v449
        %524 = vmatpush.msra.mxu0 %v447
        %525 = vmatpush.msra.mxu0 %v445
        %526 = vmatmul.f32.gmra.mxu0 %v469
        %v527 = vpop.f32.mrf.mxu0
        %v528 = vadd.f32 %v455, %v527
        %529 = vmatmul.f32.gmra.mxu0 %v472
        %v530 = vpop.f32.mrf.mxu0
        %v531 = vadd.f32 %v460, %v530
        %532 = vmatmul.f32.gmra.mxu0 %v475
        %v533 = vpop.f32.mrf.mxu0
        %v534 = vadd.f32 %v465, %v533
        %535 = vdwg.mxu0
        %v536 = vmul.f32 %v502, 0.01
        %v537 = vmul.f32 %v528, 0.01
        %v538 = vmul.f32 %v505, 0.01
        %v539 = vmul.f32 %v531, 0.01
        %v540 = vmul.f32 %v508, 0.01
        %v541 = vmul.f32 %v534, 0.01
        %v542 = vmax.f32 %v502, %v536
        %v543 = vmax.f32 %v528, %v537
        %v544 = vmax.f32 %v505, %v538
        %v545 = vmax.f32 %v531, %v539
        %v546 = vmax.f32 %v508, %v540
        %v547 = vmax.f32 %v534, %v541
        %549 = vset.pattern.permute.xlu0 0
        %550 = vperm.xlu0 %549, %v335
        %v551 = vpop.permute.xlu0 %550
        %554 = vset.pattern.permute.xlu0 0
        %555 = vperm.xlu0 %554, %v336
        %v556 = vpop.permute.xlu0 %555
        %vm558 = vcmask 171008
        %v560 = vsel %vm558, %v333, 0
        %v563 = vsel %vm558, %v334, 0
        %vm565 = vcmask 1044480
        %v567 = vsel %vm565, %v546, 0
        %v570 = vsel %vm565, %v547, 0
        %572 = vmatpush.msra.mxu0 0.0
        %573 = vmatpush.msra.mxu0 0.0
        %574 = vmatpush.msra.mxu0 0.0
        %575 = vmatpush.msra.mxu0 0.0
        %576 = vmatpush.msra.mxu0 0.0
        %577 = vmatpush.msra.mxu0 0.0
        %578 = vmatpush.msra.mxu0 0.0
        %579 = vmatpush.msra.mxu0 0.0
        %580 = vmatpush.msra.mxu0 0.0
        %581 = vmatpush.msra.mxu0 0.0
        %582 = vmatpush.msra.mxu0 0.0
        %583 = vmatpush.msra.mxu0 0.0
        %584 = vmatpush.msra.mxu0 0.0
        %585 = vmatpush.msra.mxu0 %v567
        %586 = vmatpush.msra.mxu0 %v544
        %587 = vmatpush.msra.mxu0 %v542
        %588 = vmatmul.f32.gmra.mxu0 %v560
        %v589 = vpop.f32.mrf.mxu0
        %v590 = vadd.f32 %v551, %v589
        %591 = vmatmul.f32.gmra.mxu0 %v563
        %v592 = vpop.f32.mrf.mxu0
        %v593 = vadd.f32 %v556, %v592
        %594 = vdwg.mxu0
        %595 = vmatpush.msra.mxu0 0.0
        %596 = vmatpush.msra.mxu0 0.0
        %597 = vmatpush.msra.mxu0 0.0
        %598 = vmatpush.msra.mxu0 0.0
        %599 = vmatpush.msra.mxu0 0.0
        %600 = vmatpush.msra.mxu0 0.0
        %601 = vmatpush.msra.mxu0 0.0
        %602 = vmatpush.msra.mxu0 0.0
        %603 = vmatpush.msra.mxu0 0.0
        %604 = vmatpush.msra.mxu0 0.0
        %605 = vmatpush.msra.mxu0 0.0
        %606 = vmatpush.msra.mxu0 0.0
        %607 = vmatpush.msra.mxu0 0.0
        %608 = vmatpush.msra.mxu0 %v570
        %609 = vmatpush.msra.mxu0 %v545
        %610 = vmatpush.msra.mxu0 %v543
        %611 = vmatmul.f32.gmra.mxu0 %v560
        %v612 = vpop.f32.mrf.mxu0
        %v613 = vadd.f32 %v551, %v612
        %614 = vmatmul.f32.gmra.mxu0 %v563
        %v615 = vpop.f32.mrf.mxu0
        %v616 = vadd.f32 %v556, %v615
        %617 = vdwg.mxu0
        %618 = vst [vmem:[%s316] sm:$0xff] %v590
        %619 = vst [vmem:[%s316 + $0x8] sm:$0xff] %v613
        %620 = vst [vmem:[%s316 + $0x10] sm:$0xff] %v593
        %621 = vst [vmem:[%s316 + $0x18] sm:$0xff] %v616
        %s622 = sand.u32 %s200, 1
        %s623 = scalar_lea.sflag [#allocation4], %s622
        %s624 = sand.u32 %s200, 1
        %s625 = smul.addr %s624, 32
        %s626 = scalar_lea.vmem [#allocation5], %s625
        // Predicated region
        $region53: #{tpu_custom_call.1} parent=47 // pred_check
          %p627 = pneg %p210
        $region54: #{tpu_custom_call.1} parent=47 // pred_check_branch
          %629 = sbr.rel (%p627) target = $region56
        $region55: #{tpu_custom_call.1} parent=47 // pred_region
          %s630 = smul.u32 2, %s29
          %632 = vsyncadd %s623, 0
          %s633 = smul.addr %s28, 4
          %s634 = sadd.s32 %s630, %s633
          %s635 = smul.addr %s634, 8
          %s636 = scalar_lea.hbm %s7, %s635
          %s637 = sshll.u32 %s626, 4
          %s638 = int_to_ptr.vmem [resolvable:$true] %s637
          %s639 = sshll.u32 %s636, 4
          %s640 = int_to_ptr.hbm [resolvable:$true] %s639
          %645 = dma.vmem_to_hbm [thread:$0]  %s638, 512, %s640, %s623, 256, 256, 16
        $region56: #{tpu_custom_call.1} parent=47 // pred_fallthru
          _
      $region48: #{tpu_custom_call.1} parent=5 // pred_fallthru
        _
      %p646 = scmp.le.s32.totalorder 2, %s19
      // Predicated region
      $region57: #{tpu_custom_call.1} parent=5 // pred_check
        %p647 = pneg %p646
      $region58: #{tpu_custom_call.1} parent=5 // pred_check_branch
        %649 = sbr.rel (%p647) target = $region60
      $region59: #{tpu_custom_call.1} parent=5 // pred_region
        %s650 = ssub.s32 %s19, 2
        // Predicated region
        $region61: #{tpu_custom_call.1} parent=59 // pred_check
          %p651 = pneg %p216
        $region62: #{tpu_custom_call.1} parent=59 // pred_check_branch
          %653 = sbr.rel (%p651) target = $region64
        $region63: #{tpu_custom_call.1} parent=59 // pred_region
          %s654 = sand.u32 %s201, 1
          %s655 = scalar_lea.sflag [#allocation4], %s654
          %s656 = sand.u32 %s201, 1
          %s657 = smul.addr %s656, 32
          %s658 = scalar_lea.vmem [#allocation5], %s657
          %660 = dma.done %s655, 512
        $region64: #{tpu_custom_call.1} parent=59 // pred_fallthru
          _
      $region60: #{tpu_custom_call.1} parent=5 // pred_fallthru
        _
    $region6: #{tpu_custom_call.1} parent=1 // loop_footer
      %s23 = sadd.s32 1, %s19
    $region7: #{tpu_custom_call.1} parent=1 // loop_footer_branch
      %18 = sbr.rel target = $region3
    $region8: #{tpu_custom_call.1} parent=1 // loop_exit
      _
    %661 = vsyncpa [#allocation3], 1
    %s662 = scalar_lea.sflag [#allocation3], 1
    %663 = vsyncpa %s662, 1
    %664 = vsyncpa [#allocation4], 1
    %s665 = scalar_lea.sflag [#allocation4], 1
    %666 = vsyncpa %s665, 1

</llo_original>
